<compile_context>
chip_gen: v6e
topology: v6e:2x2x1
jax: 0.10.0
libtpu: 0.0.40
codegen_flags: <defaults>
</compile_context>

<pallas_src>
import jax
import jax.numpy as jnp
from jax import lax
from jax.experimental import pallas as pl
from jax.experimental.pallas import tpu as pltpu


def basic_net_kernel(x_ref, z_ref, wx_t_ref, wz_t_ref, b_in_ref, w_out_ref,
                     b_out_ref, o_ref):
    # Contract the feature dim of both operands:
    #   (Npad, xdims) . (tb, xdims) -> (Npad, tb)   (batch on the lane axis)
    dn = (((1,), (1,)), ((), ()))
    y = lax.dot_general(wx_t_ref[...], x_ref[...], dn,
                        preferred_element_type=jnp.float32)
    y = y + lax.dot_general(wz_t_ref[...], z_ref[...], dn,
                            preferred_element_type=jnp.float32)
    y = jnp.maximum(y + b_in_ref[...], 0.0)                     # (Npad, tb)
    # hout as VPU multiply + sublane (XLU) reduction — no 1-wide MXU matmul.
    out = jnp.sum(y * w_out_ref[...], axis=0, keepdims=True)    # (1, tb)
    o_ref[...] = out + b_out_ref[0]                              # lane-dense store


def _batch_tiling(batch, max_tile=2048, lane=128):
    """Return (padded_batch, tile). tile is a multiple of 128; padded_batch
    is an exact multiple of tile. Produces >=2 grid steps when possible so the
    'parallel' batch axis shards across v7x's two TensorCores."""
    b_pad = ((batch + lane - 1) // lane) * lane
    if b_pad <= max_tile:
        if b_pad >= 2 * lane and b_pad % (2 * lane) == 0:
            return b_pad, b_pad // 2        # 2 grid steps
        return b_pad, b_pad                 # single tile (tiny batch)
    b_pad = ((batch + max_tile - 1) // max_tile) * max_tile
    return b_pad, max_tile


def basic_net_forward(x, z, params):
    """x: (B, xdims), z: (B, zdims) -> (B, 1). params from prepare_params."""
    wx_t, wz_t, b_in, w_out, b_out = params
    B, xdims = x.shape
    zdims = z.shape[1]
    Npad = wx_t.shape[0]

    B_pad, tb = _batch_tiling(B)
    x = x.astype(jnp.float32)
    z = z.astype(jnp.float32)
    if B_pad != B:
        x = jnp.pad(x, ((0, B_pad - B), (0, 0)))
        z = jnp.pad(z, ((0, B_pad - B), (0, 0)))

    grid = (B_pad // tb,)

    out = pl.pallas_call(
        basic_net_kernel,
        out_shape=jax.ShapeDtypeStruct((1, B_pad), jnp.float32),
        grid_spec=pltpu.PrefetchScalarGridSpec(
            num_scalar_prefetch=0,
            grid=grid,
            in_specs=[
                pl.BlockSpec((tb, xdims), lambda i: (i, 0)),     # x tile
                pl.BlockSpec((tb, zdims), lambda i: (i, 0)),     # z tile
                pl.BlockSpec((Npad, xdims), lambda i: (0, 0)),   # Wx^T (resident)
                pl.BlockSpec((Npad, zdims), lambda i: (0, 0)),   # Wz^T (resident)
                pl.BlockSpec((Npad, 1), lambda i: (0, 0)),       # b_in (resident)
                pl.BlockSpec((Npad, 1), lambda i: (0, 0)),       # w_out (resident)
                pl.BlockSpec(memory_space=pltpu.MemorySpace.SMEM),  # b_out scalar
            ],
            out_specs=pl.BlockSpec((1, tb), lambda i: (0, i)),
        ),
        compiler_params=pltpu.CompilerParams(
            dimension_semantics=("parallel",)),   # shards batch across TCs on v7x
    )(x, z, wx_t, wz_t, b_in, w_out, b_out)

    return out[:, :B].reshape(B, 1)


def init_params(key, xdims, zdims):
    """Synthetic init mimicking nn.Linear's uniform(-1/sqrt(fan_in), +1/sqrt(fan_in))."""
    Nint = 5 * (xdims + zdims)
    ks = jax.random.split(key, 6)

    def lin(kw, kb, fan_in, fan_out):
        bound = 1.0 / (float(fan_in) ** 0.5)
        w = jax.random.uniform(kw, (fan_in, fan_out), jnp.float32, -bound, bound)
        b = jax.random.uniform(kb, (fan_out,), jnp.float32, -bound, bound)
        return w, b

    wx, bx = lin(ks[0], ks[1], xdims, Nint)
    wz, bz = lin(ks[2], ks[3], zdims, Nint)
    wo, bo = lin(ks[4], ks[5], Nint, 1)
    return wx, bx, wz, bz, wo, bo


def prepare_params(wx, bx, wz, bz, wo, bo, sublane=8):
    """Fold biases, transpose weights to kernel layout, and pad the hidden dim
    only to the f32 sublane granule (multiple of 8)."""
    Nint = wx.shape[1]
    Npad = ((Nint + sublane - 1) // sublane) * sublane
    pad = Npad - Nint

    wx_t = jnp.pad(wx, ((0, 0), (0, pad))).T        # (Npad, xdims)
    wz_t = jnp.pad(wz, ((0, 0), (0, pad))).T        # (Npad, zdims)
    b_in = jnp.pad(bx + bz, (0, pad))[:, None]      # (Npad, 1)
    w_out = jnp.pad(wo, ((0, pad), (0, 0)))         # (Npad, 1)  zero pad -> exact
    b_out = bo.reshape(1).astype(jnp.float32)       # (1,) SMEM scalar
    return wx_t, wz_t, b_in, w_out, b_out


def reference_forward(x, z, wx, bx, wz, bz, wo, bo):
    y = jnp.maximum(x @ wx + bx + z @ wz + bz, 0.0)
    return y @ wo + bo


if __name__ == "__main__":
    xdims, zdims, batch = 4, 4, 8   # Nint = 5 * (4 + 4) = 40 (already 8-aligned)

    key = jax.random.PRNGKey(0)
    kx, kz, kp = jax.random.split(key, 3)

    x = jax.random.normal(kx, (batch, xdims), jnp.float32)
    z = jax.random.normal(kz, (batch, zdims), jnp.float32)

    raw = init_params(kp, xdims, zdims)
    params = prepare_params(*raw)

    out = basic_net_forward(x, z, params)
    out = jax.block_until_ready(out)

    ref = reference_forward(x, z, *raw)
    assert out.shape == (batch, 1), out.shape
    assert jnp.allclose(out, ref, atol=1e-5, rtol=1e-5), (out, ref)

    print("KERNEL_OK")
</pallas_src>

<mosaic_0001>
module attributes {stable_mosaic.version = 11 : i64} {
  func.func @basic_net_kernel(%arg0: i32, %arg1: memref<128x4xf32, #tpu.memory_space<vmem>>, %arg2: memref<128x4xf32, #tpu.memory_space<vmem>>, %arg3: memref<40x4xf32, #tpu.memory_space<vmem>>, %arg4: memref<40x4xf32, #tpu.memory_space<vmem>>, %arg5: memref<40x1xf32, #tpu.memory_space<vmem>>, %arg6: memref<40x1xf32, #tpu.memory_space<vmem>>, %arg7: memref<1xf32, #tpu.memory_space<smem>>, %arg8: memref<1x128xf32, #tpu.memory_space<vmem>>) attributes {dimension_semantics = [#tpu.dimension_semantics<parallel>], iteration_bounds = array<i64: 1>, scalar_prefetch = 0 : i64, scratch_operands = 0 : i64, tpu.core_type = #tpu.core_type<tc>, window_params = [{transform_indices = @transform_0, window_bounds = array<i64: 128, 4>}, {transform_indices = @transform_1, window_bounds = array<i64: 128, 4>}, {pipeline_mode = #tpu.pipeline_mode<synchronous>, transform_indices = @transform_2, window_bounds = array<i64: 40, 4>}, {pipeline_mode = #tpu.pipeline_mode<synchronous>, transform_indices = @transform_3, window_bounds = array<i64: 40, 4>}, {pipeline_mode = #tpu.pipeline_mode<synchronous>, transform_indices = @transform_4, window_bounds = array<i64: 40, 1>}, {pipeline_mode = #tpu.pipeline_mode<synchronous>, transform_indices = @transform_5, window_bounds = array<i64: 40, 1>}, {transform_indices = @transform_6, window_bounds = array<i64: 1>}, {transform_indices = @transform_7, window_bounds = array<i64: 1, 128>}]} {
    %c0 = arith.constant 0 : index
    %c0_0 = arith.constant 0 : index
    %0 = vector.load %arg3[%c0, %c0_0] : memref<40x4xf32, #tpu.memory_space<vmem>>, vector<40x4xf32>
    %c0_1 = arith.constant 0 : index
    %c0_2 = arith.constant 0 : index
    %1 = vector.load %arg1[%c0_1, %c0_2] : memref<128x4xf32, #tpu.memory_space<vmem>>, vector<128x4xf32>
    %cst = arith.constant dense<0.000000e+00> : vector<40x128xf32>
    %2 = tpu.matmul %0, %1, %cst {dimension_numbers = #tpu.dot_dimension_numbers<[1], [1], [0], [0], [0, 0, 1, 0], [], []>} : vector<40x4xf32>, vector<128x4xf32>, vector<40x128xf32> -> vector<40x128xf32>
    %c0_3 = arith.constant 0 : index
    %c0_4 = arith.constant 0 : index
    %3 = vector.load %arg4[%c0_3, %c0_4] : memref<40x4xf32, #tpu.memory_space<vmem>>, vector<40x4xf32>
    %c0_5 = arith.constant 0 : index
    %c0_6 = arith.constant 0 : index
    %4 = vector.load %arg2[%c0_5, %c0_6] : memref<128x4xf32, #tpu.memory_space<vmem>>, vector<128x4xf32>
    %cst_7 = arith.constant dense<0.000000e+00> : vector<40x128xf32>
    %5 = tpu.matmul %3, %4, %cst_7 {dimension_numbers = #tpu.dot_dimension_numbers<[1], [1], [0], [0], [0, 0, 1, 0], [], []>} : vector<40x4xf32>, vector<128x4xf32>, vector<40x128xf32> -> vector<40x128xf32>
    %6 = arith.addf %2, %5 : vector<40x128xf32>
    %c0_8 = arith.constant 0 : index
    %c0_9 = arith.constant 0 : index
    %7 = vector.load %arg5[%c0_8, %c0_9] : memref<40x1xf32, #tpu.memory_space<vmem>>, vector<40x1xf32>
    %8 = vector.broadcast %7 : vector<40x1xf32> to vector<40x128xf32>
    %9 = arith.addf %6, %8 : vector<40x128xf32>
    %cst_10 = arith.constant 0.000000e+00 : f32
    %10 = vector.broadcast %cst_10 : f32 to vector<40x128xf32>
    %11 = arith.maximumf %9, %10 : vector<40x128xf32>
    %c0_11 = arith.constant 0 : index
    %c0_12 = arith.constant 0 : index
    %12 = vector.load %arg6[%c0_11, %c0_12] : memref<40x1xf32, #tpu.memory_space<vmem>>, vector<40x1xf32>
    %13 = vector.broadcast %12 : vector<40x1xf32> to vector<40x128xf32>
    %14 = arith.mulf %11, %13 : vector<40x128xf32>
    %cst_13 = arith.constant dense<0.000000e+00> : vector<128xf32>
    %15 = vector.multi_reduction <add>, %14, %cst_13 [0] : vector<40x128xf32> to vector<128xf32>
    %16 = vector.shape_cast %15 : vector<128xf32> to vector<1x128xf32>
    %c0_14 = arith.constant 0 : index
    %17 = memref.load %arg7[%c0_14] : memref<1xf32, #tpu.memory_space<smem>>
    %18 = vector.broadcast %17 : f32 to vector<1x128xf32>
    %19 = arith.addf %16, %18 : vector<1x128xf32>
    %c0_15 = arith.constant 0 : index
    %c0_16 = arith.constant 0 : index
    %20 = vector.load %arg8[%c0_15, %c0_16] : memref<1x128xf32, #tpu.memory_space<vmem>>, vector<1x128xf32>
    tpu.vector_store %arg8[%c0_15, %c0_16], %19 {strides = array<i32>} : memref<1x128xf32, #tpu.memory_space<vmem>>, vector<1x128xf32>,
    return
  }
  func.func @transform_0(%arg0: i32) -> (i32, i32) {
    %c0_i32 = arith.constant 0 : i32
    %c0_i32_0 = arith.constant 0 : i32
    return %arg0, %c0_i32 : i32, i32
  }
  func.func @transform_1(%arg0: i32) -> (i32, i32) {
    %c0_i32 = arith.constant 0 : i32
    %c0_i32_0 = arith.constant 0 : i32
    return %arg0, %c0_i32 : i32, i32
  }
  func.func @transform_2(%arg0: i32) -> (i32, i32) {
    %c0_i32 = arith.constant 0 : i32
    %c0_i32_0 = arith.constant 0 : i32
    %c0_i32_1 = arith.constant 0 : i32
    return %c0_i32, %c0_i32_0 : i32, i32
  }
  func.func @transform_3(%arg0: i32) -> (i32, i32) {
    %c0_i32 = arith.constant 0 : i32
    %c0_i32_0 = arith.constant 0 : i32
    %c0_i32_1 = arith.constant 0 : i32
    return %c0_i32, %c0_i32_0 : i32, i32
  }
  func.func @transform_4(%arg0: i32) -> (i32, i32) {
    %c0_i32 = arith.constant 0 : i32
    %c0_i32_0 = arith.constant 0 : i32
    %c0_i32_1 = arith.constant 0 : i32
    return %c0_i32, %c0_i32_0 : i32, i32
  }
  func.func @transform_5(%arg0: i32) -> (i32, i32) {
    %c0_i32 = arith.constant 0 : i32
    %c0_i32_0 = arith.constant 0 : i32
    %c0_i32_1 = arith.constant 0 : i32
    return %c0_i32, %c0_i32_0 : i32, i32
  }
  func.func @transform_6(%arg0: i32) -> i32 {
    %c0_i32 = arith.constant 0 : i32
    %c0_i32_0 = arith.constant 0 : i32
    return %c0_i32 : i32
  }
  func.func @transform_7(%arg0: i32) -> (i32, i32) {
    %c0_i32 = arith.constant 0 : i32
    %c0_i32_0 = arith.constant 0 : i32
    return %c0_i32, %arg0 : i32, i32
  }
}

</mosaic_0001>

<llo_original>
// kernel: tpu_custom_call.1
$region0: #{tpu_custom_call.1}
  #allocation0 [shape = 'u32[]', space=smem, size = 0x4, offset = 0x4, fixed_abs, tag = 'smem constant byte address 0x4 - core index']
  #allocation1 [shape = 'u32[144,128]{1,0:T(1,128)}', space=vmem, size = 0x12000, scoped, tag = 'internal scratch']
  #allocation2 [shape = 'f32[1]{0:T(128)S(6)}', space=smem, size = 0x200, scoped, tag = 'scoped memory for tpu_custom_call.1']
  %s0 = inlined_call_operand.vmem [shape: f32[128,4], index: 0, kind: input, shape index: {}]
  %s1 = inlined_call_operand.vmem [shape: f32[128,4], index: 1, kind: input, shape index: {}]
  %s2 = inlined_call_operand.vmem [shape: f32[40,4], index: 2, kind: input, shape index: {}]
  %s3 = inlined_call_operand.vmem [shape: f32[40,4], index: 3, kind: input, shape index: {}]
  %s4 = inlined_call_operand.vmem [shape: f32[40,1], index: 4, kind: input, shape index: {}]
  %s5 = inlined_call_operand.vmem [shape: f32[40,1], index: 5, kind: input, shape index: {}]
  %s6 = inlined_call_operand.<no memory space> [shape: f32[1], index: 6, kind: input, shape index: {}]
  %s7 = inlined_call_operand.hbm [shape: f32[1,128], index: 7, kind: output, shape index: {}]
  %s8 = sld [smem:[#allocation0]]
  $region38: #{tpu_custom_call.1} parent=0
    _
  %s10 = ssub.s32 1, %s8
  %s11 = scalar_select 0, %s10, %s8
  %12 = sst [smem:[#allocation2]] %s6
  $region1: #{tpu_custom_call.1} parent=0
    #allocation3 [shape = 'u8[512]{0}', space=vmem, size = 0x400, scoped, tag = 'output window, operand 0, single buffered']
    #allocation4 [shape = 's32[1]{0}', space=sflag, size = 0x4, scoped, tag = 'scoped memory for tpu_custom_call.1']
    %13 = vsyncpa [#allocation4], 0
    // Predicated region
    $region2: #{tpu_custom_call.1} parent=1 // pred_check
      _
    $region3: #{tpu_custom_call.1} parent=1 // pred_check_branch
      %15 = sbr.rel (0) target = $region5
    $region4: #{tpu_custom_call.1} parent=1 // pred_region
      _
    $region5: #{tpu_custom_call.1} parent=1 // pred_fallthru
      _
    // Predicated region
    $region6: #{tpu_custom_call.1} parent=1 // pred_check
      _
    $region7: #{tpu_custom_call.1} parent=1 // pred_check_branch
      %17 = sbr.rel (0) target = $region9
    $region8: #{tpu_custom_call.1} parent=1 // pred_region
      _
    $region9: #{tpu_custom_call.1} parent=1 // pred_fallthru
      _
    // Predicated region
    $region10: #{tpu_custom_call.1} parent=1 // pred_check
      _
    $region11: #{tpu_custom_call.1} parent=1 // pred_check_branch
      %19 = sbr.rel (0) target = $region13
    $region12: #{tpu_custom_call.1} parent=1 // pred_region
      _
    $region13: #{tpu_custom_call.1} parent=1 // pred_fallthru
      _
    // Predicated region
    $region14: #{tpu_custom_call.1} parent=1 // pred_check
      _
    $region15: #{tpu_custom_call.1} parent=1 // pred_check_branch
      %21 = sbr.rel (0) target = $region17
    $region16: #{tpu_custom_call.1} parent=1 // pred_region
      _
    $region17: #{tpu_custom_call.1} parent=1 // pred_fallthru
      _
    // Predicated region
    $region18: #{tpu_custom_call.1} parent=1 // pred_check
      _
    $region19: #{tpu_custom_call.1} parent=1 // pred_check_branch
      %23 = sbr.rel (0) target = $region21
    $region20: #{tpu_custom_call.1} parent=1 // pred_region
      _
    $region21: #{tpu_custom_call.1} parent=1 // pred_fallthru
      _
    // Predicated region
    $region22: #{tpu_custom_call.1} parent=1 // pred_check
      _
    $region23: #{tpu_custom_call.1} parent=1 // pred_check_branch
      %25 = sbr.rel (0) target = $region25
    $region24: #{tpu_custom_call.1} parent=1 // pred_region
      _
    $region25: #{tpu_custom_call.1} parent=1 // pred_fallthru
      _
    // Predicated region
    $region26: #{tpu_custom_call.1} parent=1 // pred_check
      _
    $region27: #{tpu_custom_call.1} parent=1 // pred_check_branch
      %27 = sbr.rel (0) target = $region29
    $region28: #{tpu_custom_call.1} parent=1 // pred_region
      _
    $region29: #{tpu_custom_call.1} parent=1 // pred_fallthru
      _
    %v28 = vld [vmem:[%s2] sm:$0xff]
    %v29 = vld [vmem:[%s2 + $0x8] sm:$0xff]
    %v30 = vld [vmem:[%s2 + $0x10] sm:$0xff]
    %v31 = vld [vmem:[%s2 + $0x18] sm:$0xff]
    %v32 = vld [vmem:[%s2 + $0x20] sm:$0xff]
    %v33 = vld [vmem:[%s0] sm:$0xff]
    %v34 = vld [vmem:[%s0 + $0x8] sm:$0xff]
    %v35 = vld [vmem:[%s0 + $0x10] sm:$0xff]
    %v36 = vld [vmem:[%s0 + $0x18] sm:$0xff]
    %v37 = vld [vmem:[%s0 + $0x20] sm:$0xff]
    %v38 = vld [vmem:[%s0 + $0x28] sm:$0xff]
    %v39 = vld [vmem:[%s0 + $0x30] sm:$0xff]
    %v40 = vld [vmem:[%s0 + $0x38] sm:$0xff]
    %v41 = vld [vmem:[%s0 + $0x40] sm:$0xff]
    %v42 = vld [vmem:[%s0 + $0x48] sm:$0xff]
    %v43 = vld [vmem:[%s0 + $0x50] sm:$0xff]
    %v44 = vld [vmem:[%s0 + $0x58] sm:$0xff]
    %v45 = vld [vmem:[%s0 + $0x60] sm:$0xff]
    %v46 = vld [vmem:[%s0 + $0x68] sm:$0xff]
    %v47 = vld [vmem:[%s0 + $0x70] sm:$0xff]
    %v48 = vld [vmem:[%s0 + $0x78] sm:$0xff]
    %v49 = vld [vmem:[%s3] sm:$0xff]
    %v50 = vld [vmem:[%s3 + $0x8] sm:$0xff]
    %v51 = vld [vmem:[%s3 + $0x10] sm:$0xff]
    %v52 = vld [vmem:[%s3 + $0x18] sm:$0xff]
    %v53 = vld [vmem:[%s3 + $0x20] sm:$0xff]
    %v54 = vld [vmem:[%s1] sm:$0xff]
    %v55 = vld [vmem:[%s1 + $0x8] sm:$0xff]
    %v56 = vld [vmem:[%s1 + $0x10] sm:$0xff]
    %v57 = vld [vmem:[%s1 + $0x18] sm:$0xff]
    %v58 = vld [vmem:[%s1 + $0x20] sm:$0xff]
    %v59 = vld [vmem:[%s1 + $0x28] sm:$0xff]
    %v60 = vld [vmem:[%s1 + $0x30] sm:$0xff]
    %v61 = vld [vmem:[%s1 + $0x38] sm:$0xff]
    %v62 = vld [vmem:[%s1 + $0x40] sm:$0xff]
    %v63 = vld [vmem:[%s1 + $0x48] sm:$0xff]
    %v64 = vld [vmem:[%s1 + $0x50] sm:$0xff]
    %v65 = vld [vmem:[%s1 + $0x58] sm:$0xff]
    %v66 = vld [vmem:[%s1 + $0x60] sm:$0xff]
    %v67 = vld [vmem:[%s1 + $0x68] sm:$0xff]
    %v68 = vld [vmem:[%s1 + $0x70] sm:$0xff]
    %v69 = vld [vmem:[%s1 + $0x78] sm:$0xff]
    %vm70 = vcmask 31744
    %v72 = vsel %vm70, %v49, 0
    %v75 = vsel %vm70, %v50, 0
    %v78 = vsel %vm70, %v51, 0
    %v81 = vsel %vm70, %v52, 0
    %v84 = vsel %vm70, %v53, 0
    %v87 = vsel %vm70, %v54, 0
    %v90 = vsel %vm70, %v55, 0
    %v93 = vsel %vm70, %v56, 0
    %v96 = vsel %vm70, %v57, 0
    %v99 = vsel %vm70, %v58, 0
    %v102 = vsel %vm70, %v59, 0
    %v105 = vsel %vm70, %v60, 0
    %v108 = vsel %vm70, %v61, 0
    %v111 = vsel %vm70, %v62, 0
    %v114 = vsel %vm70, %v63, 0
    %v117 = vsel %vm70, %v64, 0
    %v120 = vsel %vm70, %v65, 0
    %v123 = vsel %vm70, %v66, 0
    %v126 = vsel %vm70, %v67, 0
    %v129 = vsel %vm70, %v68, 0
    %v132 = vsel %vm70, %v69, 0
    %134 = vmatprep.subr.mxu0 0.0
    %135 = vmatpush1.xpose.msra.mxu0 %v132
    %136 = vmatprep.subr.mxu0 0.0
    %137 = vmatpush1.xpose.msra.mxu0 %v129
    %138 = vmatprep.subr.mxu0 0.0
    %139 = vmatpush1.xpose.msra.mxu0 %v126
    %140 = vmatprep.subr.mxu0 0.0
    %141 = vmatpush1.xpose.msra.mxu0 %v123
    %142 = vmatprep.subr.mxu0 0.0
    %143 = vmatpush1.xpose.msra.mxu0 %v120
    %144 = vmatprep.subr.mxu0 0.0
    %145 = vmatpush1.xpose.msra.mxu0 %v117
    %146 = vmatprep.subr.mxu0 0.0
    %147 = vmatpush1.xpose.msra.mxu0 %v114
    %148 = vmatprep.subr.mxu0 0.0
    %149 = vmatpush1.xpose.msra.mxu0 %v111
    %150 = vmatprep.subr.mxu0 0.0
    %151 = vmatpush1.xpose.msra.mxu0 %v108
    %152 = vmatprep.subr.mxu0 0.0
    %153 = vmatpush1.xpose.msra.mxu0 %v105
    %154 = vmatprep.subr.mxu0 0.0
    %155 = vmatpush1.xpose.msra.mxu0 %v102
    %156 = vmatprep.subr.mxu0 0.0
    %157 = vmatpush1.xpose.msra.mxu0 %v99
    %158 = vmatprep.subr.mxu0 0.0
    %159 = vmatpush1.xpose.msra.mxu0 %v96
    %160 = vmatprep.subr.mxu0 0.0
    %161 = vmatpush1.xpose.msra.mxu0 %v93
    %162 = vmatprep.subr.mxu0 0.0
    %163 = vmatpush1.xpose.msra.mxu0 %v90
    %164 = vmatprep.subr.mxu0 0.0
    %165 = vmatpush1.xpose.msra.mxu0 %v87
    %166 = vmatprep.subr.mxu0 0.0
    %167 = vmatpush2.xpose.msra.mxu0 0.0
    %168 = vmatprep.subr.mxu0 0.0
    %169 = vmatpush2.xpose.msra.mxu0 0.0
    %170 = vmatprep.subr.mxu0 0.0
    %171 = vmatpush2.xpose.msra.mxu0 0.0
    %172 = vmatprep.subr.mxu0 0.0
    %173 = vmatpush2.xpose.msra.mxu0 0.0
    %174 = vmatprep.subr.mxu0 0.0
    %175 = vmatpush2.xpose.msra.mxu0 0.0
    %176 = vmatprep.subr.mxu0 0.0
    %177 = vmatpush2.xpose.msra.mxu0 0.0
    %178 = vmatprep.subr.mxu0 0.0
    %179 = vmatpush2.xpose.msra.mxu0 0.0
    %180 = vmatprep.subr.mxu0 0.0
    %181 = vmatpush2.xpose.msra.mxu0 0.0
    %182 = vmatprep.subr.mxu0 0.0
    %183 = vmatpush2.xpose.msra.mxu0 0.0
    %184 = vmatprep.subr.mxu0 0.0
    %185 = vmatpush2.xpose.msra.mxu0 0.0
    %186 = vmatprep.subr.mxu0 0.0
    %187 = vmatpush2.xpose.msra.mxu0 0.0
    %188 = vmatprep.subr.mxu0 0.0
    %189 = vmatpush2.xpose.msra.mxu0 0.0
    %190 = vmatprep.subr.mxu0 0.0
    %191 = vmatpush2.xpose.msra.mxu0 0.0
    %192 = vmatprep.subr.mxu0 0.0
    %193 = vmatpush2.xpose.msra.mxu0 0.0
    %194 = vmatprep.subr.mxu0 0.0
    %195 = vmatpush2.xpose.msra.mxu0 0.0
    %196 = vmatprep.subr.mxu0 0.0
    %197 = vmatpush2.xpose.msra.mxu0 0.0
    %198 = vmatprep.mubr.f32.mxu0 0.0
    %199 = vmatmul.mubr.f32.gmra.mxu0 %v72
    %v200 = vpop.f32.mrf.mxu0
    %v201 = vadd.f32 0.0, %v200
    %v202 = vpop.f32.mrf.mxu0
    %203 = vmatprep.mubr.f32.mxu0 0.0
    %204 = vmatmul.mubr.f32.gmra.mxu0 %v75
    %v205 = vpop.f32.mrf.mxu0
    %v206 = vadd.f32 0.0, %v205
    %v207 = vpop.f32.mrf.mxu0
    %208 = vmatprep.mubr.f32.mxu0 0.0
    %209 = vmatmul.mubr.f32.gmra.mxu0 %v78
    %v210 = vpop.f32.mrf.mxu0
    %v211 = vadd.f32 0.0, %v210
    %v212 = vpop.f32.mrf.mxu0
    %213 = vmatprep.mubr.f32.mxu0 0.0
    %214 = vmatmul.mubr.f32.gmra.mxu0 %v81
    %v215 = vpop.f32.mrf.mxu0
    %v216 = vadd.f32 0.0, %v215
    %v217 = vpop.f32.mrf.mxu0
    %218 = vmatprep.mubr.f32.mxu0 0.0
    %219 = vmatmul.mubr.f32.gmra.mxu0 %v84
    %v220 = vpop.f32.mrf.mxu0
    %v221 = vadd.f32 0.0, %v220
    %v222 = vpop.f32.mrf.mxu0
    %223 = vdwg.mxu0
    %v225 = vsel %vm70, %v28, 0
    %v228 = vsel %vm70, %v29, 0
    %v231 = vsel %vm70, %v30, 0
    %v234 = vsel %vm70, %v31, 0
    %v237 = vsel %vm70, %v32, 0
    %v240 = vsel %vm70, %v33, 0
    %v243 = vsel %vm70, %v34, 0
    %v246 = vsel %vm70, %v35, 0
    %v249 = vsel %vm70, %v36, 0
    %v252 = vsel %vm70, %v37, 0
    %v255 = vsel %vm70, %v38, 0
    %v258 = vsel %vm70, %v39, 0
    %v261 = vsel %vm70, %v40, 0
    %v264 = vsel %vm70, %v41, 0
    %v267 = vsel %vm70, %v42, 0
    %v270 = vsel %vm70, %v43, 0
    %v273 = vsel %vm70, %v44, 0
    %v276 = vsel %vm70, %v45, 0
    %v279 = vsel %vm70, %v46, 0
    %v282 = vsel %vm70, %v47, 0
    %v285 = vsel %vm70, %v48, 0
    %287 = vmatprep.subr.mxu0 0.0
    %288 = vmatpush1.xpose.msra.mxu0 %v285
    %289 = vmatprep.subr.mxu0 0.0
    %290 = vmatpush1.xpose.msra.mxu0 %v282
    %291 = vmatprep.subr.mxu0 0.0
    %292 = vmatpush1.xpose.msra.mxu0 %v279
    %293 = vmatprep.subr.mxu0 0.0
    %294 = vmatpush1.xpose.msra.mxu0 %v276
    %295 = vmatprep.subr.mxu0 0.0
    %296 = vmatpush1.xpose.msra.mxu0 %v273
    %297 = vmatprep.subr.mxu0 0.0
    %298 = vmatpush1.xpose.msra.mxu0 %v270
    %299 = vmatprep.subr.mxu0 0.0
    %300 = vmatpush1.xpose.msra.mxu0 %v267
    %301 = vmatprep.subr.mxu0 0.0
    %302 = vmatpush1.xpose.msra.mxu0 %v264
    %303 = vmatprep.subr.mxu0 0.0
    %304 = vmatpush1.xpose.msra.mxu0 %v261
    %305 = vmatprep.subr.mxu0 0.0
    %306 = vmatpush1.xpose.msra.mxu0 %v258
    %307 = vmatprep.subr.mxu0 0.0
    %308 = vmatpush1.xpose.msra.mxu0 %v255
    %309 = vmatprep.subr.mxu0 0.0
    %310 = vmatpush1.xpose.msra.mxu0 %v252
    %311 = vmatprep.subr.mxu0 0.0
    %312 = vmatpush1.xpose.msra.mxu0 %v249
    %313 = vmatprep.subr.mxu0 0.0
    %314 = vmatpush1.xpose.msra.mxu0 %v246
    %315 = vmatprep.subr.mxu0 0.0
    %316 = vmatpush1.xpose.msra.mxu0 %v243
    %317 = vmatprep.subr.mxu0 0.0
    %318 = vmatpush1.xpose.msra.mxu0 %v240
    %319 = vmatprep.subr.mxu0 0.0
    %320 = vmatpush2.xpose.msra.mxu0 0.0
    %321 = vmatprep.subr.mxu0 0.0
    %322 = vmatpush2.xpose.msra.mxu0 0.0
    %323 = vmatprep.subr.mxu0 0.0
    %324 = vmatpush2.xpose.msra.mxu0 0.0
    %325 = vmatprep.subr.mxu0 0.0
    %326 = vmatpush2.xpose.msra.mxu0 0.0
    %327 = vmatprep.subr.mxu0 0.0
    %328 = vmatpush2.xpose.msra.mxu0 0.0
    %329 = vmatprep.subr.mxu0 0.0
    %330 = vmatpush2.xpose.msra.mxu0 0.0
    %331 = vmatprep.subr.mxu0 0.0
    %332 = vmatpush2.xpose.msra.mxu0 0.0
    %333 = vmatprep.subr.mxu0 0.0
    %334 = vmatpush2.xpose.msra.mxu0 0.0
    %335 = vmatprep.subr.mxu0 0.0
    %336 = vmatpush2.xpose.msra.mxu0 0.0
    %337 = vmatprep.subr.mxu0 0.0
    %338 = vmatpush2.xpose.msra.mxu0 0.0
    %339 = vmatprep.subr.mxu0 0.0
    %340 = vmatpush2.xpose.msra.mxu0 0.0
    %341 = vmatprep.subr.mxu0 0.0
    %342 = vmatpush2.xpose.msra.mxu0 0.0
    %343 = vmatprep.subr.mxu0 0.0
    %344 = vmatpush2.xpose.msra.mxu0 0.0
    %345 = vmatprep.subr.mxu0 0.0
    %346 = vmatpush2.xpose.msra.mxu0 0.0
    %347 = vmatprep.subr.mxu0 0.0
    %348 = vmatpush2.xpose.msra.mxu0 0.0
    %349 = vmatprep.subr.mxu0 0.0
    %350 = vmatpush2.xpose.msra.mxu0 0.0
    %351 = vmatprep.mubr.f32.mxu0 0.0
    %352 = vmatmul.mubr.f32.gmra.mxu0 %v225
    %v353 = vpop.f32.mrf.mxu0
    %v354 = vadd.f32 %v201, %v353
    %v355 = vpop.f32.mrf.mxu0
    %356 = vmatprep.mubr.f32.mxu0 0.0
    %357 = vmatmul.mubr.f32.gmra.mxu0 %v228
    %v358 = vpop.f32.mrf.mxu0
    %v359 = vadd.f32 %v206, %v358
    %v360 = vpop.f32.mrf.mxu0
    %361 = vmatprep.mubr.f32.mxu0 0.0
    %362 = vmatmul.mubr.f32.gmra.mxu0 %v231
    %v363 = vpop.f32.mrf.mxu0
    %v364 = vadd.f32 %v211, %v363
    %v365 = vpop.f32.mrf.mxu0
    %366 = vmatprep.mubr.f32.mxu0 0.0
    %367 = vmatmul.mubr.f32.gmra.mxu0 %v234
    %v368 = vpop.f32.mrf.mxu0
    %v369 = vadd.f32 %v216, %v368
    %v370 = vpop.f32.mrf.mxu0
    %371 = vmatprep.mubr.f32.mxu0 0.0
    %372 = vmatmul.mubr.f32.gmra.mxu0 %v237
    %v373 = vpop.f32.mrf.mxu0
    %v374 = vadd.f32 %v221, %v373
    %v375 = vpop.f32.mrf.mxu0
    %376 = vdwg.mxu0
    %v377 = vld [vmem:[%s4] sm:$0xff]
    %v378 = vld [vmem:[%s4 + $0x8] sm:$0xff]
    %v379 = vld [vmem:[%s4 + $0x10] sm:$0xff]
    %v380 = vld [vmem:[%s4 + $0x18] sm:$0xff]
    %v381 = vld [vmem:[%s4 + $0x20] sm:$0xff]
    %383 = vset.pattern.permute.xlu0 0
    %384 = vperm.xlu0 %383, %v377
    %v385 = vpop.permute.xlu0 %384
    %388 = vset.pattern.permute.xlu0 0
    %389 = vperm.xlu0 %388, %v378
    %v390 = vpop.permute.xlu0 %389
    %393 = vset.pattern.permute.xlu0 0
    %394 = vperm.xlu0 %393, %v379
    %v395 = vpop.permute.xlu0 %394
    %398 = vset.pattern.permute.xlu0 0
    %399 = vperm.xlu0 %398, %v380
    %v400 = vpop.permute.xlu0 %399
    %403 = vset.pattern.permute.xlu0 0
    %404 = vperm.xlu0 %403, %v381
    %v405 = vpop.permute.xlu0 %404
    %v407 = vadd.f32 %v354, %v385
    %v408 = vadd.f32 %v359, %v390
    %v409 = vadd.f32 %v364, %v395
    %v410 = vadd.f32 %v369, %v400
    %v411 = vadd.f32 %v374, %v405
    %v412 = vmax.f32 %v407, 0.0
    %v413 = vmax.f32 %v408, 0.0
    %v414 = vmax.f32 %v409, 0.0
    %v415 = vmax.f32 %v410, 0.0
    %v416 = vmax.f32 %v411, 0.0
    %v417 = vld [vmem:[%s5] sm:$0xff]
    %v418 = vld [vmem:[%s5 + $0x8] sm:$0xff]
    %v419 = vld [vmem:[%s5 + $0x10] sm:$0xff]
    %v420 = vld [vmem:[%s5 + $0x18] sm:$0xff]
    %v421 = vld [vmem:[%s5 + $0x20] sm:$0xff]
    %423 = vset.pattern.permute.xlu0 0
    %424 = vperm.xlu0 %423, %v417
    %v425 = vpop.permute.xlu0 %424
    %428 = vset.pattern.permute.xlu0 0
    %429 = vperm.xlu0 %428, %v418
    %v430 = vpop.permute.xlu0 %429
    %433 = vset.pattern.permute.xlu0 0
    %434 = vperm.xlu0 %433, %v419
    %v435 = vpop.permute.xlu0 %434
    %438 = vset.pattern.permute.xlu0 0
    %439 = vperm.xlu0 %438, %v420
    %v440 = vpop.permute.xlu0 %439
    %443 = vset.pattern.permute.xlu0 0
    %444 = vperm.xlu0 %443, %v421
    %v445 = vpop.permute.xlu0 %444
    %v447 = vmul.f32 %v412, %v425
    %v448 = vmul.f32 %v413, %v430
    %v449 = vmul.f32 %v414, %v435
    %v450 = vmul.f32 %v415, %v440
    %v451 = vmul.f32 %v416, %v445
    %v452 = vadd.f32 %v447, %v448
    %v453 = vadd.f32 %v452, %v449
    %v454 = vadd.f32 %v453, %v450
    %v455 = vadd.f32 %v454, %v451
    %v456 = vrot.slane %v455, 4
    %v457 = vadd.f32 %v455, %v456
    %v458 = vrot.slane %v457, 2
    %v459 = vadd.f32 %v457, %v458
    %v460 = vrot.slane %v459, 1
    %v461 = vadd.f32 %v459, %v460
    %s462 = sld [smem:[#allocation2]]
    %v463 = vstv %s462
    %v464 = vadd.f32 %v461, %v463
    %465 = vst [vmem:[#allocation3] sm:$0x1] %v464
    // Predicated region
    $region30: #{tpu_custom_call.1} parent=1 // pred_check
      _
    $region31: #{tpu_custom_call.1} parent=1 // pred_check_branch
      %467 = sbr.rel (0) target = $region33
    $region32: #{tpu_custom_call.1} parent=1 // pred_region
      %s469 = ssub.s32 16, 16
      %470 = vsyncadd [#allocation4], %s469
      %s472 = sshll.u32 [#allocation3], 4
      %s473 = int_to_ptr.vmem [resolvable:$true] %s472
      %475 = dma.vmem_to_hbm [thread:$0]  %s473, 16, %s7, [#allocation4]
    $region33: #{tpu_custom_call.1} parent=1 // pred_fallthru
      _
    // Predicated region
    $region34: #{tpu_custom_call.1} parent=1 // pred_check
      _
    $region35: #{tpu_custom_call.1} parent=1 // pred_check_branch
      %477 = sbr.rel (0) target = $region37
    $region36: #{tpu_custom_call.1} parent=1 // pred_region
      %478 = dma.done [#allocation4], 16
    $region37: #{tpu_custom_call.1} parent=1 // pred_fallthru
      _
    %479 = vsyncpa [#allocation4], 1

</llo_original>
